<compile_context>
chip_gen: v6e
topology: v6e:2x2x1
jax: 0.10.0
libtpu: 0.0.40
codegen_flags: <defaults>
</compile_context>

<pallas_src>
import functools

import jax
import jax.numpy as jnp
from jax import lax
from jax.experimental import pallas as pl
from jax.experimental.pallas import tpu as pltpu


def _round_up(x, m):
    return ((x + m - 1) // m) * m


def _choose_tile_m(m_total, target_m=512):
    """Largest multiple-of-8 divisor of m_total that is <= target_m and leaves
    >= 2 grid steps (megacore balance on v7x). Falls back to the full extent
    (single step) when no such divisor exists."""
    cands = [d for d in range(8, m_total, 8)
             if m_total % d == 0 and d <= target_m]
    return max(cands) if cands else m_total


def _matmul_bias_act_kernel(p_ref, w_ref, b_ref, o_ref, *, cout, apply_relu):
    """One grid step: M-tile of the im2col matmul + fused BN bias + ReLU.

    p_ref: (tm, kc_pad)        bf16 im2col patches (K zero-padded to 128)
    w_ref: (kc_pad, cout_pad)  bf16 weight with BN scale folded in, resident
    b_ref: (1, cout)           f32 folded BN bias = beta - mean * scale
    o_ref: (tm, cout)          f32 output tile (real Cout, no lane padding)
    """
    acc = jnp.dot(p_ref[...], w_ref[...],
                  preferred_element_type=jnp.float32)        # (tm, cout_pad) f32
    y = acc[:, :cout] + b_ref[...]                           # drop MXU N padding
    if apply_relu:
        y = jnp.maximum(y, 0.0)
    o_ref[...] = y.astype(o_ref.dtype)


def conv_bn_relu(x_nchw, weight_oihw, gamma, beta, running_mean, running_var,
                 *, stride=1, padding=None, groups=1, eps=1e-5,
                 activation="ReLU", target_tile_m=512, lane=128):
    assert groups == 1  # TODO(synk): grouped convolution not implemented.
    if activation not in (None, "ReLU"):
        # TODO(synk): other activations from the module's Activation factory.
        raise NotImplementedError(f"activation={activation!r}")

    cout, cin, k, k2 = weight_oihw.shape
    assert k == k2
    # padding=None -> k//2 autopad ('same'-style), as in YOLO-style Conv blocks.
    # TODO(synk): confirm against the target framework; PyTorch Conv2d itself
    #             does not accept padding=None.
    pad = (k // 2) if padding is None else padding

    n, c, h, w = x_nchw.shape
    assert c == cin
    h_out = (h + 2 * pad - k) // stride + 1
    w_out = (w + 2 * pad - k) // stride + 1

    # ---------------- wrapper-side im2col (bf16, K padded to 128) -----------
    x = jnp.transpose(x_nchw, (0, 2, 3, 1)).astype(jnp.bfloat16)   # NHWC bf16
    x = jnp.pad(x, ((0, 0), (pad, pad), (pad, pad), (0, 0)))
    hs = (h_out - 1) * stride + 1
    ws = (w_out - 1) * stride + 1
    taps = []
    for kh in range(k):                                            # kh-major ...
        for kw in range(k):                                        # ... kw, cin fastest
            taps.append(x[:, kh:kh + hs:stride, kw:kw + ws:stride, :])
    patches = jnp.concatenate(taps, axis=-1)                       # (n,h_out,w_out,k*k*cin)

    kc = k * k * cin
    kc_pad = _round_up(kc, lane)                                   # lane-dense K
    m_total = n * h_out * w_out
    patches = jnp.pad(patches, ((0, 0), (0, 0), (0, 0), (0, kc_pad - kc)))
    patches = patches.reshape(m_total, kc_pad)                     # (M, K) bf16

    # ---------------- weight: fold BN scale, pad, bf16 ----------------------
    inv_std = gamma.astype(jnp.float32) / jnp.sqrt(
        running_var.astype(jnp.float32) + eps)
    bias = (beta.astype(jnp.float32)
            - running_mean.astype(jnp.float32) * inv_std).reshape(1, cout)

    cout_pad = _round_up(cout, lane)                               # MXU N dim only
    w2d = jnp.transpose(weight_oihw, (2, 3, 1, 0)).reshape(kc, cout)
    w2d = w2d.astype(jnp.float32) * inv_std[None, :]               # fold BN scale
    w2d = jnp.pad(w2d, ((0, kc_pad - kc), (0, cout_pad - cout))).astype(jnp.bfloat16)

    # ---------------- tiling & VMEM budget ----------------------------------
    tm = _choose_tile_m(m_total, target_tile_m)
    grid = (m_total // tm,)

    # Per-step footprint (double-buffered patch/out + resident weight), with
    # VMEM lane padding of the narrow output accounted for.
    vmem_need = (2 * tm * kc_pad * 2                       # patches bf16
                 + 2 * tm * _round_up(cout, lane) * 4      # output f32 (lane-padded)
                 + kc_pad * cout_pad * 2                   # resident weight bf16
                 + 2 * lane * 4)                           # bias
    vmem_limit = int(min(max(2 * vmem_need, 16 * 2 ** 20), 48 * 2 ** 20))

    kern = functools.partial(_matmul_bias_act_kernel, cout=cout,
                             apply_relu=(activation == "ReLU"))

    out2d = pl.pallas_call(
        kern,
        out_shape=jax.ShapeDtypeStruct((m_total, cout), jnp.float32),
        grid=grid,
        in_specs=[
            pl.BlockSpec((tm, kc_pad), lambda i: (i, 0)),          # patch tile
            pl.BlockSpec((kc_pad, cout_pad), lambda i: (0, 0)),    # resident weight
            pl.BlockSpec((1, cout), lambda i: (0, 0)),             # resident bias
        ],
        out_specs=pl.BlockSpec((tm, cout), lambda i: (i, 0)),
        compiler_params=pltpu.CompilerParams(
            dimension_semantics=("parallel",),
            vmem_limit_bytes=vmem_limit),
    )(patches, w2d, bias)

    # (M, Cout) -> NHWC -> NCHW to match the PyTorch module.
    out = out2d.reshape(n, h_out, w_out, cout)
    return jnp.transpose(out, (0, 3, 1, 2))


def _reference(x_nchw, weight_oihw, gamma, beta, mean, var,
               *, stride=1, padding=None, eps=1e-5):
    """Pure f32 inference reference: Conv2d(bias=False) -> BatchNorm2d -> ReLU."""
    k = weight_oihw.shape[-1]
    pad = (k // 2) if padding is None else padding
    y = lax.conv_general_dilated(
        x_nchw.astype(jnp.float32), weight_oihw.astype(jnp.float32),
        window_strides=(stride, stride),
        padding=[(pad, pad), (pad, pad)],
        dimension_numbers=("NCHW", "OIHW", "NCHW"))
    inv_std = gamma / jnp.sqrt(var + eps)
    scale = inv_std.reshape(1, -1, 1, 1)
    bias = (beta - mean * inv_std).reshape(1, -1, 1, 1)
    return jnp.maximum(y * scale + bias, 0.0)


if __name__ == "__main__":
    # Module config: Conv(in_channel=4, out_channel=8, kernel_size=3,
    #                     stride=1, padding=None -> 1, groups=1, activation="ReLU")
    N, CIN, H, W = 2, 4, 16, 16
    COUT, K = 8, 3

    key = jax.random.PRNGKey(0)
    kx, kw, kg, kb, km, kv = jax.random.split(key, 6)

    # Pre-round x to bf16-representable values so the bf16-fed kernel and the
    # f32 reference see identical activations; the remaining difference is the
    # bf16 rounding of the scale-folded weight (max abs err ~3e-3 here).
    x = jax.random.normal(kx, (N, CIN, H, W), dtype=jnp.float32)
    x = x.astype(jnp.bfloat16).astype(jnp.float32)
    weight = jax.random.normal(kw, (COUT, CIN, K, K), dtype=jnp.float32) * 0.1
    weight = weight.astype(jnp.bfloat16).astype(jnp.float32)
    gamma = jax.random.normal(kg, (COUT,), dtype=jnp.float32) * 0.1 + 1.0
    beta = jax.random.normal(kb, (COUT,), dtype=jnp.float32) * 0.1
    running_mean = jax.random.normal(km, (COUT,), dtype=jnp.float32) * 0.1
    running_var = jax.random.uniform(kv, (COUT,), dtype=jnp.float32,
                                     minval=0.5, maxval=1.5)

    out = conv_bn_relu(x, weight, gamma, beta, running_mean, running_var,
                       stride=1, padding=None, groups=1)
    out = jax.block_until_ready(out)

    ref = _reference(x, weight, gamma, beta, running_mean, running_var,
                     stride=1, padding=None)
    assert out.shape == (N, COUT, H, W)
    # Tolerance covers bf16 quantization of the BN-folded weight (MXU is fed bf16).
    assert jnp.allclose(out, ref, atol=1e-2, rtol=1e-2), \
        f"max abs err = {jnp.max(jnp.abs(out - ref))}"

    print("KERNEL_OK")
</pallas_src>

<mosaic_0001>
module attributes {stable_mosaic.version = 11 : i64} {
  func.func @_matmul_bias_act_kernel(%arg0: i32, %arg1: memref<256x128xbf16, #tpu.memory_space<vmem>>, %arg2: memref<128x128xbf16, #tpu.memory_space<vmem>>, %arg3: memref<1x8xf32, #tpu.memory_space<vmem>>, %arg4: memref<256x8xf32, #tpu.memory_space<vmem>>) attributes {dimension_semantics = [#tpu.dimension_semantics<parallel>], iteration_bounds = array<i64: 2>, scalar_prefetch = 0 : i64, scratch_operands = 0 : i64, tpu.core_type = #tpu.core_type<tc>, window_params = [{transform_indices = @transform_0, window_bounds = array<i64: 256, 128>}, {pipeline_mode = #tpu.pipeline_mode<synchronous>, transform_indices = @transform_1, window_bounds = array<i64: 128, 128>}, {pipeline_mode = #tpu.pipeline_mode<synchronous>, transform_indices = @transform_2, window_bounds = array<i64: 1, 8>}, {transform_indices = @transform_3, window_bounds = array<i64: 256, 8>}]} {
    %c0 = arith.constant 0 : index
    %c0_0 = arith.constant 0 : index
    %0 = vector.load %arg1[%c0, %c0_0] : memref<256x128xbf16, #tpu.memory_space<vmem>>, vector<256x128xbf16>
    %c0_1 = arith.constant 0 : index
    %c0_2 = arith.constant 0 : index
    %1 = vector.load %arg2[%c0_1, %c0_2] : memref<128x128xbf16, #tpu.memory_space<vmem>>, vector<128x128xbf16>
    %cst = arith.constant dense<0.000000e+00> : vector<256x128xf32>
    %2 = tpu.matmul %0, %1, %cst {dimension_numbers = #tpu.dot_dimension_numbers<[1], [0], [0], [1], [0, 0, 1, 1], [], []>} : vector<256x128xbf16>, vector<128x128xbf16>, vector<256x128xf32> -> vector<256x128xf32>
    %3 = vector.extract_strided_slice %2 {offsets = [0, 0], sizes = [256, 8], strides = [1, 1]} : vector<256x128xf32> to vector<256x8xf32>
    %c0_3 = arith.constant 0 : index
    %c0_4 = arith.constant 0 : index
    %4 = vector.load %arg3[%c0_3, %c0_4] : memref<1x8xf32, #tpu.memory_space<vmem>>, vector<1x8xf32>
    %5 = vector.broadcast %4 : vector<1x8xf32> to vector<256x8xf32>
    %6 = arith.addf %3, %5 : vector<256x8xf32>
    %cst_5 = arith.constant 0.000000e+00 : f32
    %7 = vector.broadcast %cst_5 : f32 to vector<256x8xf32>
    %8 = arith.maximumf %6, %7 : vector<256x8xf32>
    %c0_6 = arith.constant 0 : index
    %c0_7 = arith.constant 0 : index
    %9 = vector.load %arg4[%c0_6, %c0_7] : memref<256x8xf32, #tpu.memory_space<vmem>>, vector<256x8xf32>
    tpu.vector_store %arg4[%c0_6, %c0_7], %8 {strides = array<i32>} : memref<256x8xf32, #tpu.memory_space<vmem>>, vector<256x8xf32>,
    return
  }
  func.func @transform_0(%arg0: i32) -> (i32, i32) {
    %c0_i32 = arith.constant 0 : i32
    %c0_i32_0 = arith.constant 0 : i32
    return %arg0, %c0_i32 : i32, i32
  }
  func.func @transform_1(%arg0: i32) -> (i32, i32) {
    %c0_i32 = arith.constant 0 : i32
    %c0_i32_0 = arith.constant 0 : i32
    %c0_i32_1 = arith.constant 0 : i32
    return %c0_i32, %c0_i32_0 : i32, i32
  }
  func.func @transform_2(%arg0: i32) -> (i32, i32) {
    %c0_i32 = arith.constant 0 : i32
    %c0_i32_0 = arith.constant 0 : i32
    %c0_i32_1 = arith.constant 0 : i32
    return %c0_i32, %c0_i32_0 : i32, i32
  }
  func.func @transform_3(%arg0: i32) -> (i32, i32) {
    %c0_i32 = arith.constant 0 : i32
    %c0_i32_0 = arith.constant 0 : i32
    return %arg0, %c0_i32 : i32, i32
  }
}

</mosaic_0001>

<llo_original>
// kernel: tpu_custom_call.1
$region0: #{tpu_custom_call.1}
  #allocation0 [shape = 'u32[]', space=smem, size = 0x4, offset = 0x4, fixed_abs, tag = 'smem constant byte address 0x4 - core index']
  #allocation1 [shape = 'u32[144,128]{1,0:T(1,128)}', space=vmem, size = 0x12000, scoped, tag = 'internal scratch']
  %s0 = inlined_call_operand.hbm [shape: bf16[512,128], index: 0, kind: input, shape index: {}]
  %s1 = inlined_call_operand.hbm [shape: bf16[128,128], index: 1, kind: input, shape index: {}]
  %s2 = inlined_call_operand.vmem [shape: f32[1,8], index: 2, kind: input, shape index: {}]
  %s3 = inlined_call_operand.vmem [shape: f32[512,8], index: 3, kind: output, shape index: {}]
  %s4 = sld [smem:[#allocation0]]
  $region53: #{tpu_custom_call.1} parent=0
    _
  %s6 = ssub.s32 1, %s4
  %s7 = scalar_select 0, %s6, %s4
  $region1: #{tpu_custom_call.1} parent=0
    #allocation2 [shape = 'u8[131072]{0}', space=vmem, size = 0x20000, scoped, tag = 'input window, operand 0']
    #allocation3 [shape = 's32[2]{0}', space=sflag, size = 0x8, scoped, tag = 'scoped memory for tpu_custom_call.1']
    #allocation4 [shape = 'u8[32768]{0}', space=vmem, size = 0x8000, scoped, tag = 'input window, operand 1, single buffered']
    #allocation5 [shape = 's32[1]{0}', space=sflag, size = 0x4, scoped, tag = 'scoped memory for tpu_custom_call.1']
    %8 = vsyncpa [#allocation3], 0
    %s9 = scalar_lea.sflag [#allocation3], 1
    %10 = vsyncpa %s9, 0
    %11 = vsyncpa [#allocation5], 0
    loop: start=0, step=1, limit=4
    $region2: #{tpu_custom_call.1} parent=1 // loop_pre_header
      _
    $region3: #{tpu_custom_call.1} parent=1 // loop_header
      %s13 = sphi 0, %s17
      %p14 = scmp.ge.s32.totalorder %s13, 4
      %s23 = sphi 0, %s25
      %s26 = sphi 0, %s23
      %s27 = sphi 0, %s26
      %s43 = sphi 0, %s27
      %s47 = sphi 0, %s47
      %s49 = sphi 0, %s47
      %s50 = sphi 0, %s49
      %s64 = sphi 0, %s50
      %s68 = sphi 0, %s68
      %s70 = sphi 0, %s68
      %s71 = sphi 0, %s70
      %s85 = sphi 0, %s71
      %s91 = sphi 0, %s93
      %s94 = sphi 0, %s91
      %s95 = sphi 0, %s94
      %s111 = sphi 0, %s95
    $region4: #{tpu_custom_call.1} parent=1 // loop_header_branch
      %16 = sbr.rel (%p14) target = $region8
    $region5: #{tpu_custom_call.1} parent=1 // loop_body
      %s18 = ssub.s32 %s13, 1
      %s19 = ssub.s32 %s13, 2
      %s20 = sadd.s32 %s13, 1
      %s21 = ssub.s32 %s13, %s20
      %p22 = scmp.eq.s32.totalorder %s21, 0
      %s24 = sadd.s32 %s23, 1
      %s25 = scalar_select %p22, %s23, %s24
      %p28 = pneg %p22
      %p29 = scmp.eq.s32.totalorder %s13, 1
      %p30 = por %p28, %p29
      %p31 = scmp.ne.s32.totalorder %s23, %s26
      %p32 = scmp.eq.s32.totalorder %s13, 0
      %p33 = por %p31, %p32
      %p34 = scmp.ne.s32.totalorder %s23, %s26
      %p35 = scmp.eq.s32.totalorder %s18, 1
      %p36 = por %p34, %p35
      %p37 = scmp.ne.s32.totalorder %s26, %s27
      %p38 = scmp.eq.s32.totalorder %s18, 0
      %p39 = por %p37, %p38
      %p40 = scmp.ne.s32.totalorder %s26, %s27
      %p41 = scmp.eq.s32.totalorder %s19, 1
      %p42 = por %p40, %p41
      %p44 = scmp.ne.s32.totalorder %s27, %s43
      %p45 = scmp.eq.s32.totalorder %s19, 0
      %p46 = por %p44, %p45
      %s48 = sadd.s32 %s47, 1
      %p51 = scmp.eq.s32.totalorder %s13, 1
      %p52 = scmp.ne.s32.totalorder %s47, %s49
      %p53 = scmp.eq.s32.totalorder %s13, 0
      %p54 = por %p52, %p53
      %p55 = scmp.ne.s32.totalorder %s47, %s49
      %p56 = scmp.eq.s32.totalorder %s18, 1
      %p57 = por %p55, %p56
      %p58 = scmp.ne.s32.totalorder %s49, %s50
      %p59 = scmp.eq.s32.totalorder %s18, 0
      %p60 = por %p58, %p59
      %p61 = scmp.ne.s32.totalorder %s49, %s50
      %p62 = scmp.eq.s32.totalorder %s19, 1
      %p63 = por %p61, %p62
      %p65 = scmp.ne.s32.totalorder %s50, %s64
      %p66 = scmp.eq.s32.totalorder %s19, 0
      %p67 = por %p65, %p66
      %s69 = sadd.s32 %s68, 1
      %p72 = scmp.eq.s32.totalorder %s13, 1
      %p73 = scmp.ne.s32.totalorder %s68, %s70
      %p74 = scmp.eq.s32.totalorder %s13, 0
      %p75 = por %p73, %p74
      %p76 = scmp.ne.s32.totalorder %s68, %s70
      %p77 = scmp.eq.s32.totalorder %s18, 1
      %p78 = por %p76, %p77
      %p79 = scmp.ne.s32.totalorder %s70, %s71
      %p80 = scmp.eq.s32.totalorder %s18, 0
      %p81 = por %p79, %p80
      %p82 = scmp.ne.s32.totalorder %s70, %s71
      %p83 = scmp.eq.s32.totalorder %s19, 1
      %p84 = por %p82, %p83
      %p86 = scmp.ne.s32.totalorder %s71, %s85
      %p87 = scmp.eq.s32.totalorder %s19, 0
      %p88 = por %p86, %p87
      %s89 = ssub.s32 %s13, %s20
      %p90 = scmp.eq.s32.totalorder %s89, 0
      %s92 = sadd.s32 %s91, 1
      %s93 = scalar_select %p90, %s91, %s92
      %p96 = pneg %p90
      %p97 = scmp.eq.s32.totalorder %s13, 1
      %p98 = por %p96, %p97
      %p99 = scmp.ne.s32.totalorder %s91, %s94
      %p100 = scmp.eq.s32.totalorder %s13, 0
      %p101 = por %p99, %p100
      %p102 = scmp.ne.s32.totalorder %s91, %s94
      %p103 = scmp.eq.s32.totalorder %s18, 1
      %p104 = por %p102, %p103
      %p105 = scmp.ne.s32.totalorder %s94, %s95
      %p106 = scmp.eq.s32.totalorder %s18, 0
      %p107 = por %p105, %p106
      %p108 = scmp.ne.s32.totalorder %s94, %s95
      %p109 = scmp.eq.s32.totalorder %s19, 1
      %p110 = por %p108, %p109
      %p112 = scmp.ne.s32.totalorder %s95, %s111
      %p113 = scmp.eq.s32.totalorder %s19, 0
      %p114 = por %p112, %p113
      %p115 = scmp.le.s32.totalorder 1, %s13
      %p116 = scmp.lt.s32.totalorder %s13, 3
      %p117 = pnand %p115, %p116
      %p118 = pneg %p117
      // Predicated region
      $region9: #{tpu_custom_call.1} parent=5 // pred_check
        _
      $region10: #{tpu_custom_call.1} parent=5 // pred_check_branch
        %120 = sbr.rel (%p117) target = $region12
      $region11: #{tpu_custom_call.1} parent=5 // pred_region
        %s121 = ssub.s32 %s13, 1
        // Predicated region
        $region13: #{tpu_custom_call.1} parent=11 // pred_check
          %p122 = pneg %p60
        $region14: #{tpu_custom_call.1} parent=11 // pred_check_branch
          %124 = sbr.rel (%p122) target = $region16
        $region15: #{tpu_custom_call.1} parent=11 // pred_region
          %s126 = ssub.s32 1024, 1024
          %127 = vsyncadd [#allocation5], %s126
          %s128 = sshll.u32 [#allocation4], 4
          %s129 = int_to_ptr.vmem [resolvable:$true] %s128
          %134 = dma.hbm_to_vmem [thread:$0]  %s1, 1024, %s129, [#allocation5], 64, 64, 4
        $region16: #{tpu_custom_call.1} parent=11 // pred_fallthru
          _
        // Predicated region
        $region17: #{tpu_custom_call.1} parent=11 // pred_check
          %p135 = pneg %p81
        $region18: #{tpu_custom_call.1} parent=11 // pred_check_branch
          %137 = sbr.rel (%p135) target = $region20
        $region19: #{tpu_custom_call.1} parent=11 // pred_region
          _
        $region20: #{tpu_custom_call.1} parent=11 // pred_fallthru
          _
      $region12: #{tpu_custom_call.1} parent=5 // pred_fallthru
        _
      %p138 = scmp.lt.s32.totalorder %s13, 2
      // Predicated region
      $region21: #{tpu_custom_call.1} parent=5 // pred_check
        %p139 = pneg %p138
      $region22: #{tpu_custom_call.1} parent=5 // pred_check_branch
        %141 = sbr.rel (%p139) target = $region24
      $region23: #{tpu_custom_call.1} parent=5 // pred_region
        // Predicated region
        $region25: #{tpu_custom_call.1} parent=23 // pred_check
          %p142 = pneg %p33
        $region26: #{tpu_custom_call.1} parent=23 // pred_check_branch
          %144 = sbr.rel (%p142) target = $region28
        $region27: #{tpu_custom_call.1} parent=23 // pred_region
          %s145 = sand.u32 %s23, 1
          %s146 = scalar_lea.sflag [#allocation3], %s145
          %s147 = sand.u32 %s23, 1
          %s148 = smul.addr %s147, 128
          %s149 = scalar_lea.vmem [#allocation2], %s148
          %s150 = smul.u32 32, %s13
          %s152 = ssub.s32 2048, 2048
          %153 = vsyncadd %s146, %s152
          %s154 = smul.addr %s150, 64
          %s155 = scalar_lea.hbm %s0, %s154
          %s156 = sshll.u32 %s149, 4
          %s157 = int_to_ptr.vmem [resolvable:$true] %s156
          %162 = dma.hbm_to_vmem [thread:$0]  %s155, 2048, %s157, %s146, 64, 64, 4
        $region28: #{tpu_custom_call.1} parent=23 // pred_fallthru
          _
      $region24: #{tpu_custom_call.1} parent=5 // pred_fallthru
        _
      %p163 = scmp.le.s32.totalorder 1, %s13
      %p164 = scmp.lt.s32.totalorder %s13, 3
      %p165 = pnand %p163, %p164
      %p166 = pneg %p165
      // Predicated region
      $region29: #{tpu_custom_call.1} parent=5 // pred_check
        _
      $region30: #{tpu_custom_call.1} parent=5 // pred_check_branch
        %168 = sbr.rel (%p165) target = $region32
      $region31: #{tpu_custom_call.1} parent=5 // pred_region
        %s169 = ssub.s32 %s13, 1
        %s170 = sand.u32 %s26, 1
        %s171 = scalar_lea.sflag [#allocation3], %s170
        %s172 = sand.u32 %s26, 1
        %s173 = smul.addr %s172, 128
        %s174 = scalar_lea.vmem [#allocation2], %s173
        // Predicated region
        $region33: #{tpu_custom_call.1} parent=31 // pred_check
          %p175 = pneg %p39
        $region34: #{tpu_custom_call.1} parent=31 // pred_check_branch
          %177 = sbr.rel (%p175) target = $region36
        $region35: #{tpu_custom_call.1} parent=31 // pred_region
          %178 = dma.done %s171, 2048
        $region36: #{tpu_custom_call.1} parent=31 // pred_fallthru
          _
        // Predicated region
        $region37: #{tpu_custom_call.1} parent=31 // pred_check
          %p179 = pneg %p60
        $region38: #{tpu_custom_call.1} parent=31 // pred_check_branch
          %181 = sbr.rel (%p179) target = $region40
        $region39: #{tpu_custom_call.1} parent=31 // pred_region
          %182 = dma.done [#allocation5], 1024
        $region40: #{tpu_custom_call.1} parent=31 // pred_fallthru
          _
        %s183 = sand.u32 %s26, 1
        %s184 = scalar_lea.sflag [#allocation3], %s183
        %s185 = sand.u32 %s26, 1
        %s186 = smul.addr %s185, 128
        %s187 = scalar_lea.vmem [#allocation2], %s186
        %p188 = pneg %p39
        %p189 = pneg %p36
        %p190 = pneg %p60
        %p191 = pneg %p57
        %p192 = pneg %p81
        %p193 = pneg %p78
        %p194 = pneg %p107
        %p195 = pneg %p104
        %s196 = smul.u32 32, %s18
        %p197 = scmp.lt.s32.totalorder %s196, 63
        %s198 = scalar_select %p197, %s196, 63
        %s199 = smul.addr %s198, 8
        %s200 = scalar_lea.vmem %s3, %s199
        %s201 = smul.u32 32, %s18
        %s202 = smul.u32 32, %s18
        %p203 = scmp.lt.s32.totalorder %s202, 63
        %s204 = scalar_select %p203, %s202, 63
        %s205 = smul.addr %s204, 8
        %s206 = scalar_lea.vmem %s3, %s205
        %s207 = smul.u32 32, %s18
        %v209 = vld [vmem:[%s174] sm:$0xf]
        %v210 = vld [vmem:[%s174 + $0x4] sm:$0xf]
        %v211 = vld [vmem:[%s174 + $0x8] sm:$0xf]
        %v212 = vld [vmem:[%s174 + $0xc] sm:$0xf]
        %v213 = vld [vmem:[%s174 + $0x10] sm:$0xf]
        %v214 = vld [vmem:[%s174 + $0x14] sm:$0xf]
        %v215 = vld [vmem:[%s174 + $0x18] sm:$0xf]
        %v216 = vld [vmem:[%s174 + $0x1c] sm:$0xf]
        %v217 = vld [vmem:[%s174 + $0x20] sm:$0xf]
        %v218 = vld [vmem:[%s174 + $0x24] sm:$0xf]
        %v219 = vld [vmem:[%s174 + $0x28] sm:$0xf]
        %v220 = vld [vmem:[%s174 + $0x2c] sm:$0xf]
        %v221 = vld [vmem:[%s174 + $0x30] sm:$0xf]
        %v222 = vld [vmem:[%s174 + $0x34] sm:$0xf]
        %v223 = vld [vmem:[%s174 + $0x38] sm:$0xf]
        %v224 = vld [vmem:[%s174 + $0x3c] sm:$0xf]
        %v225 = vld [vmem:[%s174 + $0x40] sm:$0xf]
        %v226 = vld [vmem:[%s174 + $0x44] sm:$0xf]
        %v227 = vld [vmem:[%s174 + $0x48] sm:$0xf]
        %v228 = vld [vmem:[%s174 + $0x4c] sm:$0xf]
        %v229 = vld [vmem:[%s174 + $0x50] sm:$0xf]
        %v230 = vld [vmem:[%s174 + $0x54] sm:$0xf]
        %v231 = vld [vmem:[%s174 + $0x58] sm:$0xf]
        %v232 = vld [vmem:[%s174 + $0x5c] sm:$0xf]
        %v233 = vld [vmem:[%s174 + $0x60] sm:$0xf]
        %v234 = vld [vmem:[%s174 + $0x64] sm:$0xf]
        %v235 = vld [vmem:[%s174 + $0x68] sm:$0xf]
        %v236 = vld [vmem:[%s174 + $0x6c] sm:$0xf]
        %v237 = vld [vmem:[%s174 + $0x70] sm:$0xf]
        %v238 = vld [vmem:[%s174 + $0x74] sm:$0xf]
        %v239 = vld [vmem:[%s174 + $0x78] sm:$0xf]
        %v240 = vld [vmem:[%s174 + $0x7c] sm:$0xf]
        %v241 = vld [vmem:[#allocation4] sm:$0xf]
        %v242 = vld [vmem:[#allocation4 + $0x4] sm:$0xf]
        %v243 = vld [vmem:[#allocation4 + $0x8] sm:$0xf]
        %v244 = vld [vmem:[#allocation4 + $0xc] sm:$0xf]
        %v245 = vld [vmem:[#allocation4 + $0x10] sm:$0xf]
        %v246 = vld [vmem:[#allocation4 + $0x14] sm:$0xf]
        %v247 = vld [vmem:[#allocation4 + $0x18] sm:$0xf]
        %v248 = vld [vmem:[#allocation4 + $0x1c] sm:$0xf]
        %v249 = vld [vmem:[#allocation4 + $0x20] sm:$0xf]
        %v250 = vld [vmem:[#allocation4 + $0x24] sm:$0xf]
        %v251 = vld [vmem:[#allocation4 + $0x28] sm:$0xf]
        %v252 = vld [vmem:[#allocation4 + $0x2c] sm:$0xf]
        %v253 = vld [vmem:[#allocation4 + $0x30] sm:$0xf]
        %v254 = vld [vmem:[#allocation4 + $0x34] sm:$0xf]
        %v255 = vld [vmem:[#allocation4 + $0x38] sm:$0xf]
        %v256 = vld [vmem:[#allocation4 + $0x3c] sm:$0xf]
        %v289 = vunpack.c.l.b16 %v209
        %v290 = vunpack.c.l.b16 %v210
        %v291 = vunpack.c.l.b16 %v211
        %v292 = vunpack.c.l.b16 %v212
        %v293 = vunpack.c.l.b16 %v213
        %v294 = vunpack.c.l.b16 %v214
        %v295 = vunpack.c.l.b16 %v215
        %v296 = vunpack.c.l.b16 %v216
        %v297 = vunpack.c.l.b16 %v217
        %v298 = vunpack.c.l.b16 %v218
        %v299 = vunpack.c.l.b16 %v219
        %v300 = vunpack.c.l.b16 %v220
        %v301 = vunpack.c.l.b16 %v221
        %v302 = vunpack.c.l.b16 %v222
        %v303 = vunpack.c.l.b16 %v223
        %v304 = vunpack.c.l.b16 %v224
        %v305 = vunpack.c.l.b16 %v225
        %v306 = vunpack.c.l.b16 %v226
        %v307 = vunpack.c.l.b16 %v227
        %v308 = vunpack.c.l.b16 %v228
        %v309 = vunpack.c.l.b16 %v229
        %v310 = vunpack.c.l.b16 %v230
        %v311 = vunpack.c.l.b16 %v231
        %v312 = vunpack.c.l.b16 %v232
        %v313 = vunpack.c.l.b16 %v233
        %v314 = vunpack.c.l.b16 %v234
        %v315 = vunpack.c.l.b16 %v235
        %v316 = vunpack.c.l.b16 %v236
        %v317 = vunpack.c.l.b16 %v237
        %v318 = vunpack.c.l.b16 %v238
        %v319 = vunpack.c.l.b16 %v239
        %v320 = vunpack.c.l.b16 %v240
        %v321 = vpack.c.b16 %v290, %v289
        %v322 = vpack.c.b16 %v292, %v291
        %v323 = vpack.c.b16 %v294, %v293
        %v324 = vpack.c.b16 %v296, %v295
        %v325 = vpack.c.b16 %v298, %v297
        %v326 = vpack.c.b16 %v300, %v299
        %v327 = vpack.c.b16 %v302, %v301
        %v328 = vpack.c.b16 %v304, %v303
        %v329 = vpack.c.b16 %v306, %v305
        %v330 = vpack.c.b16 %v308, %v307
        %v331 = vpack.c.b16 %v310, %v309
        %v332 = vpack.c.b16 %v312, %v311
        %v333 = vpack.c.b16 %v314, %v313
        %v334 = vpack.c.b16 %v316, %v315
        %v335 = vpack.c.b16 %v318, %v317
        %v336 = vpack.c.b16 %v320, %v319
        %v369 = vunpack.c.l.b16 %v241
        %v370 = vunpack.c.l.b16 %v242
        %v371 = vunpack.c.l.b16 %v243
        %v372 = vunpack.c.l.b16 %v244
        %v373 = vunpack.c.l.b16 %v245
        %v374 = vunpack.c.l.b16 %v246
        %v375 = vunpack.c.l.b16 %v247
        %v376 = vunpack.c.l.b16 %v248
        %v377 = vunpack.c.l.b16 %v249
        %v378 = vunpack.c.l.b16 %v250
        %v379 = vunpack.c.l.b16 %v251
        %v380 = vunpack.c.l.b16 %v252
        %v381 = vunpack.c.l.b16 %v253
        %v382 = vunpack.c.l.b16 %v254
        %v383 = vunpack.c.l.b16 %v255
        %v384 = vunpack.c.l.b16 %v256
        %v385 = vpack.c.b16 %v370, %v369
        %v386 = vpack.c.b16 %v372, %v371
        %v387 = vpack.c.b16 %v374, %v373
        %v388 = vpack.c.b16 %v376, %v375
        %v389 = vpack.c.b16 %v378, %v377
        %v390 = vpack.c.b16 %v380, %v379
        %v391 = vpack.c.b16 %v382, %v381
        %v392 = vpack.c.b16 %v384, %v383
        %401 = vmatprep.subr.bf16.mxu0 0
        %402 = vmatpush1.bf16.msra.mxu0 %v392
        %403 = vmatprep.subr.bf16.mxu0 0
        %404 = vmatpush1.bf16.msra.mxu0 %v391
        %405 = vmatprep.subr.bf16.mxu0 0
        %406 = vmatpush1.bf16.msra.mxu0 %v390
        %407 = vmatprep.subr.bf16.mxu0 0
        %408 = vmatpush1.bf16.msra.mxu0 %v389
        %409 = vmatprep.subr.bf16.mxu0 0
        %410 = vmatpush1.bf16.msra.mxu0 %v388
        %411 = vmatprep.subr.bf16.mxu0 0
        %412 = vmatpush1.bf16.msra.mxu0 %v387
        %413 = vmatprep.subr.bf16.mxu0 0
        %414 = vmatpush1.bf16.msra.mxu0 %v386
        %415 = vmatprep.subr.bf16.mxu0 0
        %416 = vmatpush1.bf16.msra.mxu0 %v385
        %417 = vmatprep.subr.bf16.mxu0 0
        %418 = vmatpush2.bf16.msra.mxu0 0
        %419 = vmatprep.subr.bf16.mxu0 0
        %420 = vmatpush2.bf16.msra.mxu0 0
        %421 = vmatprep.subr.bf16.mxu0 0
        %422 = vmatpush2.bf16.msra.mxu0 0
        %423 = vmatprep.subr.bf16.mxu0 0
        %424 = vmatpush2.bf16.msra.mxu0 0
        %425 = vmatprep.subr.bf16.mxu0 0
        %426 = vmatpush2.bf16.msra.mxu0 0
        %427 = vmatprep.subr.bf16.mxu0 0
        %428 = vmatpush2.bf16.msra.mxu0 0
        %429 = vmatprep.subr.bf16.mxu0 0
        %430 = vmatpush2.bf16.msra.mxu0 0
        %431 = vmatprep.subr.bf16.mxu0 0
        %432 = vmatpush2.bf16.msra.mxu0 0
        %433 = vmatprep.mubr.bf16.mxu0 0
        %434 = vmatmul.mubr.bf16.gmra.mxu0 %v321
        %v435 = vpop.f32.mrf.mxu0
        %v436 = vadd.f32 0.0, %v435
        %v437 = vpop.f32.mrf.mxu0
        %v438 = vpop.f32.mrf.mxu0
        %v439 = vadd.f32 0.0, %v438
        %v440 = vpop.f32.mrf.mxu0
        %441 = vmatprep.mubr.bf16.mxu0 0
        %442 = vmatmul.mubr.bf16.gmra.mxu0 %v322
        %v443 = vpop.f32.mrf.mxu0
        %v444 = vadd.f32 0.0, %v443
        %v445 = vpop.f32.mrf.mxu0
        %v446 = vpop.f32.mrf.mxu0
        %v447 = vadd.f32 0.0, %v446
        %v448 = vpop.f32.mrf.mxu0
        %449 = vmatprep.mubr.bf16.mxu0 0
        %450 = vmatmul.mubr.bf16.gmra.mxu0 %v323
        %v451 = vpop.f32.mrf.mxu0
        %v452 = vadd.f32 0.0, %v451
        %v453 = vpop.f32.mrf.mxu0
        %v454 = vpop.f32.mrf.mxu0
        %v455 = vadd.f32 0.0, %v454
        %v456 = vpop.f32.mrf.mxu0
        %457 = vmatprep.mubr.bf16.mxu0 0
        %458 = vmatmul.mubr.bf16.gmra.mxu0 %v324
        %v459 = vpop.f32.mrf.mxu0
        %v460 = vadd.f32 0.0, %v459
        %v461 = vpop.f32.mrf.mxu0
        %v462 = vpop.f32.mrf.mxu0
        %v463 = vadd.f32 0.0, %v462
        %v464 = vpop.f32.mrf.mxu0
        %465 = vmatprep.mubr.bf16.mxu0 0
        %466 = vmatmul.mubr.bf16.gmra.mxu0 %v325
        %v467 = vpop.f32.mrf.mxu0
        %v468 = vadd.f32 0.0, %v467
        %v469 = vpop.f32.mrf.mxu0
        %v470 = vpop.f32.mrf.mxu0
        %v471 = vadd.f32 0.0, %v470
        %v472 = vpop.f32.mrf.mxu0
        %473 = vmatprep.mubr.bf16.mxu0 0
        %474 = vmatmul.mubr.bf16.gmra.mxu0 %v326
        %v475 = vpop.f32.mrf.mxu0
        %v476 = vadd.f32 0.0, %v475
        %v477 = vpop.f32.mrf.mxu0
        %v478 = vpop.f32.mrf.mxu0
        %v479 = vadd.f32 0.0, %v478
        %v480 = vpop.f32.mrf.mxu0
        %481 = vmatprep.mubr.bf16.mxu0 0
        %482 = vmatmul.mubr.bf16.gmra.mxu0 %v327
        %v483 = vpop.f32.mrf.mxu0
        %v484 = vadd.f32 0.0, %v483
        %v485 = vpop.f32.mrf.mxu0
        %v486 = vpop.f32.mrf.mxu0
        %v487 = vadd.f32 0.0, %v486
        %v488 = vpop.f32.mrf.mxu0
        %489 = vmatprep.mubr.bf16.mxu0 0
        %490 = vmatmul.mubr.bf16.gmra.mxu0 %v328
        %v491 = vpop.f32.mrf.mxu0
        %v492 = vadd.f32 0.0, %v491
        %v493 = vpop.f32.mrf.mxu0
        %v494 = vpop.f32.mrf.mxu0
        %v495 = vadd.f32 0.0, %v494
        %v496 = vpop.f32.mrf.mxu0
        %497 = vmatprep.mubr.bf16.mxu0 0
        %498 = vmatmul.mubr.bf16.gmra.mxu0 %v329
        %v499 = vpop.f32.mrf.mxu0
        %v500 = vadd.f32 0.0, %v499
        %v501 = vpop.f32.mrf.mxu0
        %v502 = vpop.f32.mrf.mxu0
        %v503 = vadd.f32 0.0, %v502
        %v504 = vpop.f32.mrf.mxu0
        %505 = vmatprep.mubr.bf16.mxu0 0
        %506 = vmatmul.mubr.bf16.gmra.mxu0 %v330
        %v507 = vpop.f32.mrf.mxu0
        %v508 = vadd.f32 0.0, %v507
        %v509 = vpop.f32.mrf.mxu0
        %v510 = vpop.f32.mrf.mxu0
        %v511 = vadd.f32 0.0, %v510
        %v512 = vpop.f32.mrf.mxu0
        %513 = vmatprep.mubr.bf16.mxu0 0
        %514 = vmatmul.mubr.bf16.gmra.mxu0 %v331
        %v515 = vpop.f32.mrf.mxu0
        %v516 = vadd.f32 0.0, %v515
        %v517 = vpop.f32.mrf.mxu0
        %v518 = vpop.f32.mrf.mxu0
        %v519 = vadd.f32 0.0, %v518
        %v520 = vpop.f32.mrf.mxu0
        %521 = vmatprep.mubr.bf16.mxu0 0
        %522 = vmatmul.mubr.bf16.gmra.mxu0 %v332
        %v523 = vpop.f32.mrf.mxu0
        %v524 = vadd.f32 0.0, %v523
        %v525 = vpop.f32.mrf.mxu0
        %v526 = vpop.f32.mrf.mxu0
        %v527 = vadd.f32 0.0, %v526
        %v528 = vpop.f32.mrf.mxu0
        %529 = vmatprep.mubr.bf16.mxu0 0
        %530 = vmatmul.mubr.bf16.gmra.mxu0 %v333
        %v531 = vpop.f32.mrf.mxu0
        %v532 = vadd.f32 0.0, %v531
        %v533 = vpop.f32.mrf.mxu0
        %v534 = vpop.f32.mrf.mxu0
        %v535 = vadd.f32 0.0, %v534
        %v536 = vpop.f32.mrf.mxu0
        %537 = vmatprep.mubr.bf16.mxu0 0
        %538 = vmatmul.mubr.bf16.gmra.mxu0 %v334
        %v539 = vpop.f32.mrf.mxu0
        %v540 = vadd.f32 0.0, %v539
        %v541 = vpop.f32.mrf.mxu0
        %v542 = vpop.f32.mrf.mxu0
        %v543 = vadd.f32 0.0, %v542
        %v544 = vpop.f32.mrf.mxu0
        %545 = vmatprep.mubr.bf16.mxu0 0
        %546 = vmatmul.mubr.bf16.gmra.mxu0 %v335
        %v547 = vpop.f32.mrf.mxu0
        %v548 = vadd.f32 0.0, %v547
        %v549 = vpop.f32.mrf.mxu0
        %v550 = vpop.f32.mrf.mxu0
        %v551 = vadd.f32 0.0, %v550
        %v552 = vpop.f32.mrf.mxu0
        %553 = vmatprep.mubr.bf16.mxu0 0
        %554 = vmatmul.mubr.bf16.gmra.mxu0 %v336
        %v555 = vpop.f32.mrf.mxu0
        %v556 = vadd.f32 0.0, %v555
        %v557 = vpop.f32.mrf.mxu0
        %v558 = vpop.f32.mrf.mxu0
        %v559 = vadd.f32 0.0, %v558
        %v560 = vpop.f32.mrf.mxu0
        %561 = vdwg.mxu0
        %v562 = vld [vmem:[%s2] sm:$0x1]
        %v564 = vlaneseq
        %v565 = vshrl.u32 %v564, 7
        %v566 = vsub.s32 0, %v565
        %v567 = vrot.slane %v562, %v566
        %v569 = vadd.f32 %v436, %v567
        %v570 = vadd.f32 %v439, %v567
        %v571 = vadd.f32 %v444, %v567
        %v572 = vadd.f32 %v447, %v567
        %v573 = vadd.f32 %v452, %v567
        %v574 = vadd.f32 %v455, %v567
        %v575 = vadd.f32 %v460, %v567
        %v576 = vadd.f32 %v463, %v567
        %v577 = vadd.f32 %v468, %v567
        %v578 = vadd.f32 %v471, %v567
        %v579 = vadd.f32 %v476, %v567
        %v580 = vadd.f32 %v479, %v567
        %v581 = vadd.f32 %v484, %v567
        %v582 = vadd.f32 %v487, %v567
        %v583 = vadd.f32 %v492, %v567
        %v584 = vadd.f32 %v495, %v567
        %v585 = vadd.f32 %v500, %v567
        %v586 = vadd.f32 %v503, %v567
        %v587 = vadd.f32 %v508, %v567
        %v588 = vadd.f32 %v511, %v567
        %v589 = vadd.f32 %v516, %v567
        %v590 = vadd.f32 %v519, %v567
        %v591 = vadd.f32 %v524, %v567
        %v592 = vadd.f32 %v527, %v567
        %v593 = vadd.f32 %v532, %v567
        %v594 = vadd.f32 %v535, %v567
        %v595 = vadd.f32 %v540, %v567
        %v596 = vadd.f32 %v543, %v567
        %v597 = vadd.f32 %v548, %v567
        %v598 = vadd.f32 %v551, %v567
        %v599 = vadd.f32 %v556, %v567
        %v600 = vadd.f32 %v559, %v567
        %v601 = vmax.f32 %v569, 0.0
        %v602 = vmax.f32 %v570, 0.0
        %v603 = vmax.f32 %v571, 0.0
        %v604 = vmax.f32 %v572, 0.0
        %v605 = vmax.f32 %v573, 0.0
        %v606 = vmax.f32 %v574, 0.0
        %v607 = vmax.f32 %v575, 0.0
        %v608 = vmax.f32 %v576, 0.0
        %v609 = vmax.f32 %v577, 0.0
        %v610 = vmax.f32 %v578, 0.0
        %v611 = vmax.f32 %v579, 0.0
        %v612 = vmax.f32 %v580, 0.0
        %v613 = vmax.f32 %v581, 0.0
        %v614 = vmax.f32 %v582, 0.0
        %v615 = vmax.f32 %v583, 0.0
        %v616 = vmax.f32 %v584, 0.0
        %v617 = vmax.f32 %v585, 0.0
        %v618 = vmax.f32 %v586, 0.0
        %v619 = vmax.f32 %v587, 0.0
        %v620 = vmax.f32 %v588, 0.0
        %v621 = vmax.f32 %v589, 0.0
        %v622 = vmax.f32 %v590, 0.0
        %v623 = vmax.f32 %v591, 0.0
        %v624 = vmax.f32 %v592, 0.0
        %v625 = vmax.f32 %v593, 0.0
        %v626 = vmax.f32 %v594, 0.0
        %v627 = vmax.f32 %v595, 0.0
        %v628 = vmax.f32 %v596, 0.0
        %v629 = vmax.f32 %v597, 0.0
        %v630 = vmax.f32 %v598, 0.0
        %v631 = vmax.f32 %v599, 0.0
        %v632 = vmax.f32 %v600, 0.0
        %vm633 = vcmask 64512
        %634 = vst.msk [vmem:[%s206] sm:$0xff] %vm633, %v601
        %635 = vst.msk [vmem:[%s206 + $0x8] sm:$0xff] %vm633, %v602
        %636 = vst.msk [vmem:[%s206 + $0x10] sm:$0xff] %vm633, %v603
        %637 = vst.msk [vmem:[%s206 + $0x18] sm:$0xff] %vm633, %v604
        %638 = vst.msk [vmem:[%s206 + $0x20] sm:$0xff] %vm633, %v605
        %639 = vst.msk [vmem:[%s206 + $0x28] sm:$0xff] %vm633, %v606
        %640 = vst.msk [vmem:[%s206 + $0x30] sm:$0xff] %vm633, %v607
        %641 = vst.msk [vmem:[%s206 + $0x38] sm:$0xff] %vm633, %v608
        %642 = vst.msk [vmem:[%s206 + $0x40] sm:$0xff] %vm633, %v609
        %643 = vst.msk [vmem:[%s206 + $0x48] sm:$0xff] %vm633, %v610
        %644 = vst.msk [vmem:[%s206 + $0x50] sm:$0xff] %vm633, %v611
        %645 = vst.msk [vmem:[%s206 + $0x58] sm:$0xff] %vm633, %v612
        %646 = vst.msk [vmem:[%s206 + $0x60] sm:$0xff] %vm633, %v613
        %647 = vst.msk [vmem:[%s206 + $0x68] sm:$0xff] %vm633, %v614
        %648 = vst.msk [vmem:[%s206 + $0x70] sm:$0xff] %vm633, %v615
        %649 = vst.msk [vmem:[%s206 + $0x78] sm:$0xff] %vm633, %v616
        %650 = vst.msk [vmem:[%s206 + $0x80] sm:$0xff] %vm633, %v617
        %651 = vst.msk [vmem:[%s206 + $0x88] sm:$0xff] %vm633, %v618
        %652 = vst.msk [vmem:[%s206 + $0x90] sm:$0xff] %vm633, %v619
        %653 = vst.msk [vmem:[%s206 + $0x98] sm:$0xff] %vm633, %v620
        %654 = vst.msk [vmem:[%s206 + $0xa0] sm:$0xff] %vm633, %v621
        %655 = vst.msk [vmem:[%s206 + $0xa8] sm:$0xff] %vm633, %v622
        %656 = vst.msk [vmem:[%s206 + $0xb0] sm:$0xff] %vm633, %v623
        %657 = vst.msk [vmem:[%s206 + $0xb8] sm:$0xff] %vm633, %v624
        %658 = vst.msk [vmem:[%s206 + $0xc0] sm:$0xff] %vm633, %v625
        %659 = vst.msk [vmem:[%s206 + $0xc8] sm:$0xff] %vm633, %v626
        %660 = vst.msk [vmem:[%s206 + $0xd0] sm:$0xff] %vm633, %v627
        %661 = vst.msk [vmem:[%s206 + $0xd8] sm:$0xff] %vm633, %v628
        %662 = vst.msk [vmem:[%s206 + $0xe0] sm:$0xff] %vm633, %v629
        %663 = vst.msk [vmem:[%s206 + $0xe8] sm:$0xff] %vm633, %v630
        %664 = vst.msk [vmem:[%s206 + $0xf0] sm:$0xff] %vm633, %v631
        %665 = vst.msk [vmem:[%s206 + $0xf8] sm:$0xff] %vm633, %v632
        %s666 = smul.u32 32, %s18
        %p667 = scmp.lt.s32.totalorder %s666, 63
        %s668 = scalar_select %p667, %s666, 63
        %s669 = smul.addr %s668, 8
        %s670 = scalar_lea.vmem %s3, %s669
        // Predicated region
        $region41: #{tpu_custom_call.1} parent=31 // pred_check
          %p671 = pneg %p104
        $region42: #{tpu_custom_call.1} parent=31 // pred_check_branch
          %673 = sbr.rel (%p671) target = $region44
        $region43: #{tpu_custom_call.1} parent=31 // pred_region
          %s674 = smul.u32 32, %s18
        $region44: #{tpu_custom_call.1} parent=31 // pred_fallthru
          _
      $region32: #{tpu_custom_call.1} parent=5 // pred_fallthru
        _
      %p675 = scmp.le.s32.totalorder 2, %s13
      // Predicated region
      $region45: #{tpu_custom_call.1} parent=5 // pred_check
        %p676 = pneg %p675
      $region46: #{tpu_custom_call.1} parent=5 // pred_check_branch
        %678 = sbr.rel (%p676) target = $region48
      $region47: #{tpu_custom_call.1} parent=5 // pred_region
        %s679 = ssub.s32 %s13, 2
        // Predicated region
        $region49: #{tpu_custom_call.1} parent=47 // pred_check
          %p680 = pneg %p110
        $region50: #{tpu_custom_call.1} parent=47 // pred_check_branch
          %682 = sbr.rel (%p680) target = $region52
        $region51: #{tpu_custom_call.1} parent=47 // pred_region
          %s683 = smul.u32 32, %s19
          %p684 = scmp.lt.s32.totalorder %s683, 63
          %s685 = scalar_select %p684, %s683, 63
          %s686 = smul.addr %s685, 8
          %s687 = scalar_lea.vmem %s3, %s686
        $region52: #{tpu_custom_call.1} parent=47 // pred_fallthru
          _
      $region48: #{tpu_custom_call.1} parent=5 // pred_fallthru
        _
    $region6: #{tpu_custom_call.1} parent=1 // loop_footer
      %s17 = sadd.s32 1, %s13
    $region7: #{tpu_custom_call.1} parent=1 // loop_footer_branch
      %12 = sbr.rel target = $region3
    $region8: #{tpu_custom_call.1} parent=1 // loop_exit
      _
    %688 = vsyncpa [#allocation3], 1
    %s689 = scalar_lea.sflag [#allocation3], 1
    %690 = vsyncpa %s689, 1
    %691 = vsyncpa [#allocation5], 1

</llo_original>
